<compile_context>
chip_gen: v7x
topology: tpu7x:2x2x1
jax: 0.10.0
libtpu: 0.0.40
codegen_flags: <defaults>
</compile_context>

<pallas_src>
import functools

import jax
import jax.numpy as jnp
from jax.experimental import pallas as pl
from jax.experimental.pallas import tpu as pltpu


TK_TARGET = 512     # reduction-axis tile target
TN_TARGET = 512     # output-axis tile target
LANE = 128


def _round_up(x, m):
    return ((x + m - 1) // m) * m


def _tile(dim, target):
    """Tile size (multiple of 128, <= target) and padded dim (multiple of tile)."""
    t = min(target, _round_up(dim, LANE))
    return t, _round_up(dim, t)


# ----------------------------------------------------------------------------
# Fused linear kernel: y = x @ W + b, W already laid out (K, N) in bf16,
# float32 VMEM accumulator, optional fused ReLU.  channel_mix=True additionally
# fuses the 1x1 conv (mean over the 3 input channels, fixed weight 1/3): the
# activation tile is then (tm, 3, tk).
# ----------------------------------------------------------------------------
def linear_kernel(x_ref, w_ref, b_ref, o_ref, acc_ref, *, apply_relu, channel_mix):
    k = pl.program_id(2)

    @pl.when(k == 0)
    def _():
        acc_ref[...] = jnp.zeros_like(acc_ref)

    if channel_mix:
        x = x_ref[...]                                       # (tm, 3, tk) f32
        xm = (x[:, 0, :] + x[:, 1, :] + x[:, 2, :]) * jnp.float32(1.0 / 3.0)
    else:
        xm = x_ref[...]                                      # (tm, tk) f32
    acc_ref[...] += jnp.dot(xm.astype(jnp.bfloat16), w_ref[...],
                            preferred_element_type=jnp.float32)

    @pl.when(k == pl.num_programs(2) - 1)
    def _():
        out = acc_ref[...] + b_ref[...]                      # f32 epilogue
        if apply_relu:
            out = jnp.maximum(out, 0.0)
        o_ref[...] = out.astype(o_ref.dtype)


def linear(x, layer, *, apply_relu, channel_mix=False):
    """x: (M, K_act) or (M, 3, K_act) if channel_mix.
    layer['w']: (K_pad, N_pad) bf16 pre-transposed; layer['b']: (1, N_pad) f32."""
    w, b = layer["w"], layer["b"]
    k_pad, n_pad = w.shape
    tk = min(TK_TARGET, k_pad)          # divides k_pad by construction
    tn = min(TN_TARGET, n_pad)          # divides n_pad by construction
    M = x.shape[0]
    tm = M                              # batch is tiny; single M tile

    # Align the activation's K axis with the pre-padded weight rows; padded weight
    # rows are zero so this never changes the result.  No-op for the small config.
    k_act = x.shape[-1]
    if k_act < k_pad:
        pad = [(0, 0)] * (x.ndim - 1) + [(0, k_pad - k_act)]
        x = jnp.pad(x, pad)
    elif k_act > k_pad:
        x = x[..., :k_pad]

    grid = (M // tm, n_pad // tn, k_pad // tk)

    if channel_mix:
        x_spec = pl.BlockSpec((tm, 3, tk), lambda i, j, k: (i, 0, k))
    else:
        x_spec = pl.BlockSpec((tm, tk), lambda i, j, k: (i, k))

    kernel = functools.partial(linear_kernel, apply_relu=apply_relu,
                               channel_mix=channel_mix)

    cost = pl.CostEstimate(
        flops=2 * M * k_pad * n_pad,
        transcendentals=0,
        bytes_accessed=(w.size * w.dtype.itemsize + x.size * x.dtype.itemsize
                        + b.size * b.dtype.itemsize + M * n_pad * 4))

    return pl.pallas_call(
        kernel,
        out_shape=jax.ShapeDtypeStruct((M, n_pad), jnp.float32),
        grid_spec=pltpu.PrefetchScalarGridSpec(
            num_scalar_prefetch=0,
            grid=grid,
            in_specs=[
                x_spec,                                           # activation tile (f32)
                pl.BlockSpec((tk, tn), lambda i, j, k: (k, j)),   # (K, N) weight tile (bf16)
                pl.BlockSpec((1, tn), lambda i, j, k: (0, j)),    # bias tile (f32)
            ],
            out_specs=pl.BlockSpec((tm, tn), lambda i, j, k: (i, j)),
            scratch_shapes=[pltpu.VMEM((tm, tn), jnp.float32)],
        ),
        compiler_params=pltpu.CompilerParams(
            dimension_semantics=("parallel", "parallel", "arbitrary"),
            vmem_limit_bytes=32 * 1024 * 1024),
        cost_estimate=cost,
    )(x, w, b)


# ----------------------------------------------------------------------------
# Parameter init (deterministic, PyTorch-Linear-style uniform(+-1/sqrt(fan_in))).
# Weights are stored pre-transposed (K, N), zero-padded to tile multiples and cast
# to bf16 here (hoisted out of the forward path entirely).
# ----------------------------------------------------------------------------
def init_params(key, dims):
    params = []
    for d_in, d_out in zip(dims[:-1], dims[1:]):
        key, kw, kb = jax.random.split(key, 3)
        bound = 1.0 / (d_in ** 0.5)
        _, k_pad = _tile(d_in, TK_TARGET)
        _, n_pad = _tile(d_out, TN_TARGET)
        w = jax.random.uniform(kw, (d_in, d_out), jnp.float32, -bound, bound)
        b = jax.random.uniform(kb, (d_out,), jnp.float32, -bound, bound)
        w_p = jnp.zeros((k_pad, n_pad), jnp.float32).at[:d_in, :d_out].set(w)
        b_p = jnp.zeros((1, n_pad), jnp.float32).at[0, :d_out].set(b)
        params.append({"w": w_p.astype(jnp.bfloat16), "b": b_p, "d_out": d_out})
    return params


def siamese_forward(x, params):
    B, C, H, W = x.shape
    assert C == 3
    x3 = x.reshape(B, C, H * W)     # glue: conv1 (fixed 1/3 weights) + view fused into fc1
    h = linear(x3, params[0], apply_relu=True, channel_mix=True)   # relu(fc1(conv1(x)))
    h = linear(h, params[1], apply_relu=True)                      # relu(fc2)
    h = linear(h, params[2], apply_relu=True)                      # relu(fc3)
    h = linear(h, params[3], apply_relu=False)                     # fc4
    return h[:, :params[3]["d_out"]]                               # drop N padding (no-op here)


def siamese_forward_ref(x, params):
    """Pure-JAX reference using the same bf16-rounded weights (f32 math)."""
    B = x.shape[0]
    h = (x[:, 0] + x[:, 1] + x[:, 2]) * (1.0 / 3.0)   # 1x1 conv, weight 1/3 per channel
    h = h.reshape(B, -1)
    for i, layer in enumerate(params):
        w = layer["w"].astype(jnp.float32)
        k_pad = w.shape[0]
        if h.shape[1] < k_pad:
            h = jnp.pad(h, ((0, 0), (0, k_pad - h.shape[1])))
        h = h @ w + layer["b"]
        if i < len(params) - 1:
            h = jax.nn.relu(h)
    return h[:, :params[-1]["d_out"]]


if __name__ == "__main__":
    B, C, H, W = 2, 3, 16, 16
    dims = (H * W, 512, 256, 128, 128)   # scaled stand-ins for 62500/12288/4096/1024/128

    key = jax.random.PRNGKey(0)
    kx, kp = jax.random.split(key)
    x = jax.random.normal(kx, (B, C, H, W), jnp.float32)
    params = init_params(kp, dims)

    out = siamese_forward(x, params)
    out = jax.block_until_ready(out)

    ref = siamese_forward_ref(x, params)
    assert out.shape == (B, dims[-1]), out.shape
    assert jnp.allclose(out, ref, atol=2e-2, rtol=2e-2), (
        "max abs diff vs reference: %f" % float(jnp.max(jnp.abs(out - ref))))

    print("KERNEL_OK")
</pallas_src>

<mosaic_0001>
module attributes {stable_mosaic.version = 11 : i64} {
  func.func @linear_kernel(%arg0: i32, %arg1: i32, %arg2: i32, %arg3: memref<2x3x256xf32, #tpu.memory_space<vmem>>, %arg4: memref<256x512xbf16, #tpu.memory_space<vmem>>, %arg5: memref<1x512xf32, #tpu.memory_space<vmem>>, %arg6: memref<2x512xf32, #tpu.memory_space<vmem>>, %arg7: memref<2x512xf32, #tpu.memory_space<vmem>>) attributes {dimension_semantics = [#tpu.dimension_semantics<parallel>, #tpu.dimension_semantics<parallel>, #tpu.dimension_semantics<arbitrary>], iteration_bounds = array<i64: 1, 1, 1>, scalar_prefetch = 0 : i64, scratch_operands = 1 : i64, tpu.core_type = #tpu.core_type<tc>, window_params = [{transform_indices = @transform_0, window_bounds = array<i64: 2, 3, 256>}, {transform_indices = @transform_1, window_bounds = array<i64: 256, 512>}, {transform_indices = @transform_2, window_bounds = array<i64: 1, 512>}, {transform_indices = @transform_3, window_bounds = array<i64: 2, 512>}]} {
    %c0_i32 = arith.constant 0 : i32
    %0 = arith.cmpi eq, %arg2, %c0_i32 : i32
    %1 = arith.extui %0 : i1 to i32
    %c0_i32_0 = arith.constant 0 : i32
    %2 = arith.cmpi ne, %1, %c0_i32_0 : i32
    scf.if %2 {
      %cst_12 = arith.constant 0.000000e+00 : f32
      %23 = vector.broadcast %cst_12 : f32 to vector<2x512xf32>
      %c0_13 = arith.constant 0 : index
      %c0_14 = arith.constant 0 : index
      %24 = vector.load %arg7[%c0_13, %c0_14] : memref<2x512xf32, #tpu.memory_space<vmem>>, vector<2x512xf32>
      tpu.vector_store %arg7[%c0_13, %c0_14], %23 {strides = array<i32>} : memref<2x512xf32, #tpu.memory_space<vmem>>, vector<2x512xf32>,
    } else {
    }
    %c0 = arith.constant 0 : index
    %c0_1 = arith.constant 0 : index
    %c0_2 = arith.constant 0 : index
    %3 = vector.load %arg3[%c0, %c0_1, %c0_2] : memref<2x3x256xf32, #tpu.memory_space<vmem>>, vector<2x3x256xf32>
    %4 = vector.extract_strided_slice %3 {offsets = [0, 0, 0], sizes = [2, 1, 256], strides = [1, 1, 1]} : vector<2x3x256xf32> to vector<2x1x256xf32>
    %5 = vector.shape_cast %4 : vector<2x1x256xf32> to vector<2x256xf32>
    %6 = vector.extract_strided_slice %3 {offsets = [0, 1, 0], sizes = [2, 1, 256], strides = [1, 1, 1]} : vector<2x3x256xf32> to vector<2x1x256xf32>
    %7 = vector.shape_cast %6 : vector<2x1x256xf32> to vector<2x256xf32>
    %8 = arith.addf %5, %7 : vector<2x256xf32>
    %9 = vector.extract_strided_slice %3 {offsets = [0, 2, 0], sizes = [2, 1, 256], strides = [1, 1, 1]} : vector<2x3x256xf32> to vector<2x1x256xf32>
    %10 = vector.shape_cast %9 : vector<2x1x256xf32> to vector<2x256xf32>
    %11 = arith.addf %8, %10 : vector<2x256xf32>
    %cst = arith.constant 0.333333343 : f32
    %12 = vector.broadcast %cst : f32 to vector<2x256xf32>
    %13 = arith.mulf %11, %12 : vector<2x256xf32>
    %c0_3 = arith.constant 0 : index
    %c0_4 = arith.constant 0 : index
    %14 = vector.load %arg7[%c0_3, %c0_4] : memref<2x512xf32, #tpu.memory_space<vmem>>, vector<2x512xf32>
    %15 = arith.truncf %13 : vector<2x256xf32> to vector<2x256xbf16>
    %c0_5 = arith.constant 0 : index
    %c0_6 = arith.constant 0 : index
    %16 = vector.load %arg4[%c0_5, %c0_6] : memref<256x512xbf16, #tpu.memory_space<vmem>>, vector<256x512xbf16>
    %cst_7 = arith.constant dense<0.000000e+00> : vector<2x512xf32>
    %17 = tpu.matmul %15, %16, %cst_7 {dimension_numbers = #tpu.dot_dimension_numbers<[1], [0], [0], [1], [0, 0, 1, 1], [], []>} : vector<2x256xbf16>, vector<256x512xbf16>, vector<2x512xf32> -> vector<2x512xf32>
    %18 = arith.addf %14, %17 : vector<2x512xf32>
    %c0_8 = arith.constant 0 : index
    %c0_9 = arith.constant 0 : index
    %19 = vector.load %arg7[%c0_8, %c0_9] : memref<2x512xf32, #tpu.memory_space<vmem>>, vector<2x512xf32>
    tpu.vector_store %arg7[%c0_8, %c0_9], %18 {strides = array<i32>} : memref<2x512xf32, #tpu.memory_space<vmem>>, vector<2x512xf32>,
    %c0_i32_10 = arith.constant 0 : i32
    %20 = arith.cmpi eq, %arg2, %c0_i32_10 : i32
    %21 = arith.extui %20 : i1 to i32
    %c0_i32_11 = arith.constant 0 : i32
    %22 = arith.cmpi ne, %21, %c0_i32_11 : i32
    scf.if %22 {
      %c0_12 = arith.constant 0 : index
      %c0_13 = arith.constant 0 : index
      %23 = vector.load %arg7[%c0_12, %c0_13] : memref<2x512xf32, #tpu.memory_space<vmem>>, vector<2x512xf32>
      %c0_14 = arith.constant 0 : index
      %c0_15 = arith.constant 0 : index
      %24 = vector.load %arg5[%c0_14, %c0_15] : memref<1x512xf32, #tpu.memory_space<vmem>>, vector<1x512xf32>
      %25 = vector.broadcast %24 : vector<1x512xf32> to vector<2x512xf32>
      %26 = arith.addf %23, %25 : vector<2x512xf32>
      %cst_16 = arith.constant 0.000000e+00 : f32
      %27 = vector.broadcast %cst_16 : f32 to vector<2x512xf32>
      %28 = arith.maximumf %26, %27 : vector<2x512xf32>
      %c0_17 = arith.constant 0 : index
      %c0_18 = arith.constant 0 : index
      %29 = vector.load %arg6[%c0_17, %c0_18] : memref<2x512xf32, #tpu.memory_space<vmem>>, vector<2x512xf32>
      tpu.vector_store %arg6[%c0_17, %c0_18], %28 {strides = array<i32>} : memref<2x512xf32, #tpu.memory_space<vmem>>, vector<2x512xf32>,
    } else {
    }
    return
  }
  func.func @transform_0(%arg0: i32, %arg1: i32, %arg2: i32) -> (i32, i32, i32) {
    %c0_i32 = arith.constant 0 : i32
    %c0_i32_0 = arith.constant 0 : i32
    return %arg0, %c0_i32, %arg2 : i32, i32, i32
  }
  func.func @transform_1(%arg0: i32, %arg1: i32, %arg2: i32) -> (i32, i32) {
    %c0_i32 = arith.constant 0 : i32
    return %arg2, %arg1 : i32, i32
  }
  func.func @transform_2(%arg0: i32, %arg1: i32, %arg2: i32) -> (i32, i32) {
    %c0_i32 = arith.constant 0 : i32
    %c0_i32_0 = arith.constant 0 : i32
    return %c0_i32, %arg1 : i32, i32
  }
  func.func @transform_3(%arg0: i32, %arg1: i32, %arg2: i32) -> (i32, i32) {
    %c0_i32 = arith.constant 0 : i32
    return %arg0, %arg1 : i32, i32
  }
}

</mosaic_0001>

<llo_original>
// kernel: tpu_custom_call.1
$region0: #{tpu_custom_call.1}
  #allocation0 [shape = 'u32[]', space=smem, size = 0x4, offset = 0x4, fixed_abs, tag = 'smem constant byte address 0x4 - core index']
  #allocation1 [shape = 'u32[144,128]{1,0:T(1,128)}', space=vmem, size = 0x12000, scoped, tag = 'internal scratch']
  #allocation2 [shape = 'f32[2,512]{1,0:T(2,128)}', space=vmem, size = 0x1000, scoped, tag = 'scratch operand']
  %s0 = inlined_call_operand.vmem [shape: f32[2,3,256], index: 0, kind: input, shape index: {}]
  %s1 = inlined_call_operand.hbm [shape: bf16[256,512], index: 1, kind: input, shape index: {}]
  %s2 = inlined_call_operand.vmem [shape: f32[1,512], index: 2, kind: input, shape index: {}]
  %s3 = inlined_call_operand.hbm [shape: f32[2,512], index: 3, kind: output, shape index: {}]
  %s4 = sld [smem:[#allocation0]]
  $region34: #{tpu_custom_call.1} parent=0
    _
  %s6 = ssub.s32 1, %s4
  %s7 = scalar_select 0, %s6, %s4
  $region1: #{tpu_custom_call.1} parent=0
    #allocation3 [shape = 'u8[262144]{0}', space=vmem, size = 0x40000, scoped, tag = 'input window, operand 1, single buffered']
    #allocation4 [shape = 's32[1]{0}', space=sflag, size = 0x4, scoped, tag = 'scoped memory for tpu_custom_call.1']
    #allocation5 [shape = 's32[1]{0}', space=sflag, size = 0x4, scoped, tag = 'scoped memory for tpu_custom_call.1']
    #allocation6 [shape = 'u8[4096]{0}', space=vmem, size = 0x1000, scoped, tag = 'output window, operand 0, single buffered']
    %8 = vsyncpa [#allocation4], 0
    %9 = vsyncpa [#allocation5], 0
    // Predicated region
    $region2: #{tpu_custom_call.1} parent=1 // pred_check
      _
    $region3: #{tpu_custom_call.1} parent=1 // pred_check_branch
      %11 = sbr.rel (0) target = $region5
    $region4: #{tpu_custom_call.1} parent=1 // pred_region
      _
    $region5: #{tpu_custom_call.1} parent=1 // pred_fallthru
      _
    // Predicated region
    $region6: #{tpu_custom_call.1} parent=1 // pred_check
      _
    $region7: #{tpu_custom_call.1} parent=1 // pred_check_branch
      %13 = sbr.rel (0) target = $region9
    $region8: #{tpu_custom_call.1} parent=1 // pred_region
      %s15 = ssub.s32 8192, 8192
      %16 = vsyncadd [#allocation4], %s15
      %s17 = sshll.u32 [#allocation3], 4
      %s18 = int_to_ptr.vmem [resolvable:$true] %s17
      %23 = dma.hbm_to_vmem [thread:$0]  %s1, 8192, %s18, [#allocation4], 256, 256, 16
    $region9: #{tpu_custom_call.1} parent=1 // pred_fallthru
      _
    // Predicated region
    $region10: #{tpu_custom_call.1} parent=1 // pred_check
      _
    $region11: #{tpu_custom_call.1} parent=1 // pred_check_branch
      %25 = sbr.rel (0) target = $region13
    $region12: #{tpu_custom_call.1} parent=1 // pred_region
      _
    $region13: #{tpu_custom_call.1} parent=1 // pred_fallthru
      _
    // Predicated region
    $region14: #{tpu_custom_call.1} parent=1 // pred_check
      _
    $region15: #{tpu_custom_call.1} parent=1 // pred_check_branch
      %27 = sbr.rel (0) target = $region17
    $region16: #{tpu_custom_call.1} parent=1 // pred_region
      %28 = dma.done [#allocation4], 8192
    $region17: #{tpu_custom_call.1} parent=1 // pred_fallthru
      _
    %p29 = scmp.eq.s32.totalorder 0, 0
    // Predicated region
    $region18: #{tpu_custom_call.1} parent=1 // pred_check
      %p30 = pneg %p29
    $region19: #{tpu_custom_call.1} parent=1 // pred_check_branch
      %32 = sbr.rel (%p30) target = $region21
    $region20: #{tpu_custom_call.1} parent=1 // pred_region
      %33 = vst [vmem:[#allocation2] sm:$0xff] 0.0
    $region21: #{tpu_custom_call.1} parent=1 // pred_fallthru
      _
    %v34 = vld [vmem:[%s0] sm:$0x77]
    %v35 = vld [vmem:[%s0 + $0x8] sm:$0x77]
    %v38 = vrot.slane %v34, 5
    %v39 = vrot.slane %v38, 4
    %v40 = vrot.slane %v35, 5
    %v41 = vrot.slane %v40, 4
    %v44 = vadd.f32 %v34, %v39
    %v45 = vadd.f32 %v35, %v41
    %v46 = vrot.slane %v34, 6
    %v47 = vrot.slane %v46, 4
    %v48 = vrot.slane %v35, 6
    %v49 = vrot.slane %v48, 4
    %v52 = vadd.f32 %v44, %v47
    %v53 = vadd.f32 %v45, %v49
    %v54 = vmul.f32 %v52, 0.33333334
    %v55 = vmul.f32 %v53, 0.33333334
    %v56 = vld [vmem:[#allocation2] sm:$0xff]
    %v59 = vlaneseq
    %v60 = vshrl.u32 %v59, 7
    %v61 = vsub.s32 0, %v60
    %v62 = vrot.slane %v54, %v61
    %v63 = vlaneseq
    %v64 = vshrl.u32 %v63, 7
    %v65 = vsub.s32 4, %v64
    %v66 = vrot.slane %v54, %v65
    %v67 = vlaneseq
    %v68 = vshrl.u32 %v67, 7
    %v69 = vsub.s32 0, %v68
    %v70 = vrot.slane %v55, %v69
    %v71 = vlaneseq
    %v72 = vshrl.u32 %v71, 7
    %v73 = vsub.s32 4, %v72
    %v74 = vrot.slane %v55, %v73
    %v79 = vpack.c.bf16 %v62, %v62
    %v80 = vpack.c.bf16 %v66, %v66
    %v81 = vpack.c.bf16 %v70, %v70
    %v82 = vpack.c.bf16 %v74, %v74
    %v83 = vld [vmem:[#allocation3] sm:$0xff]
    %v84 = vld [vmem:[#allocation3 + $0x8] sm:$0xff]
    %v85 = vld [vmem:[#allocation3 + $0x10] sm:$0xff]
    %v86 = vld [vmem:[#allocation3 + $0x18] sm:$0xff]
    %v87 = vld [vmem:[#allocation3 + $0x20] sm:$0xff]
    %v88 = vld [vmem:[#allocation3 + $0x28] sm:$0xff]
    %v89 = vld [vmem:[#allocation3 + $0x30] sm:$0xff]
    %v90 = vld [vmem:[#allocation3 + $0x38] sm:$0xff]
    %v91 = vld [vmem:[#allocation3 + $0x40] sm:$0xff]
    %v92 = vld [vmem:[#allocation3 + $0x48] sm:$0xff]
    %v93 = vld [vmem:[#allocation3 + $0x50] sm:$0xff]
    %v94 = vld [vmem:[#allocation3 + $0x58] sm:$0xff]
    %v95 = vld [vmem:[#allocation3 + $0x60] sm:$0xff]
    %v96 = vld [vmem:[#allocation3 + $0x68] sm:$0xff]
    %v97 = vld [vmem:[#allocation3 + $0x70] sm:$0xff]
    %v98 = vld [vmem:[#allocation3 + $0x78] sm:$0xff]
    %v99 = vld [vmem:[#allocation3 + $0x80] sm:$0xff]
    %v100 = vld [vmem:[#allocation3 + $0x88] sm:$0xff]
    %v101 = vld [vmem:[#allocation3 + $0x90] sm:$0xff]
    %v102 = vld [vmem:[#allocation3 + $0x98] sm:$0xff]
    %v103 = vld [vmem:[#allocation3 + $0xa0] sm:$0xff]
    %v104 = vld [vmem:[#allocation3 + $0xa8] sm:$0xff]
    %v105 = vld [vmem:[#allocation3 + $0xb0] sm:$0xff]
    %v106 = vld [vmem:[#allocation3 + $0xb8] sm:$0xff]
    %v107 = vld [vmem:[#allocation3 + $0xc0] sm:$0xff]
    %v108 = vld [vmem:[#allocation3 + $0xc8] sm:$0xff]
    %v109 = vld [vmem:[#allocation3 + $0xd0] sm:$0xff]
    %v110 = vld [vmem:[#allocation3 + $0xd8] sm:$0xff]
    %v111 = vld [vmem:[#allocation3 + $0xe0] sm:$0xff]
    %v112 = vld [vmem:[#allocation3 + $0xe8] sm:$0xff]
    %v113 = vld [vmem:[#allocation3 + $0xf0] sm:$0xff]
    %v114 = vld [vmem:[#allocation3 + $0xf8] sm:$0xff]
    %v115 = vld [vmem:[#allocation3 + $0x100] sm:$0xff]
    %v116 = vld [vmem:[#allocation3 + $0x108] sm:$0xff]
    %v117 = vld [vmem:[#allocation3 + $0x110] sm:$0xff]
    %v118 = vld [vmem:[#allocation3 + $0x118] sm:$0xff]
    %v119 = vld [vmem:[#allocation3 + $0x120] sm:$0xff]
    %v120 = vld [vmem:[#allocation3 + $0x128] sm:$0xff]
    %v121 = vld [vmem:[#allocation3 + $0x130] sm:$0xff]
    %v122 = vld [vmem:[#allocation3 + $0x138] sm:$0xff]
    %v123 = vld [vmem:[#allocation3 + $0x140] sm:$0xff]
    %v124 = vld [vmem:[#allocation3 + $0x148] sm:$0xff]
    %v125 = vld [vmem:[#allocation3 + $0x150] sm:$0xff]
    %v126 = vld [vmem:[#allocation3 + $0x158] sm:$0xff]
    %v127 = vld [vmem:[#allocation3 + $0x160] sm:$0xff]
    %v128 = vld [vmem:[#allocation3 + $0x168] sm:$0xff]
    %v129 = vld [vmem:[#allocation3 + $0x170] sm:$0xff]
    %v130 = vld [vmem:[#allocation3 + $0x178] sm:$0xff]
    %v131 = vld [vmem:[#allocation3 + $0x180] sm:$0xff]
    %v132 = vld [vmem:[#allocation3 + $0x188] sm:$0xff]
    %v133 = vld [vmem:[#allocation3 + $0x190] sm:$0xff]
    %v134 = vld [vmem:[#allocation3 + $0x198] sm:$0xff]
    %v135 = vld [vmem:[#allocation3 + $0x1a0] sm:$0xff]
    %v136 = vld [vmem:[#allocation3 + $0x1a8] sm:$0xff]
    %v137 = vld [vmem:[#allocation3 + $0x1b0] sm:$0xff]
    %v138 = vld [vmem:[#allocation3 + $0x1b8] sm:$0xff]
    %v139 = vld [vmem:[#allocation3 + $0x1c0] sm:$0xff]
    %v140 = vld [vmem:[#allocation3 + $0x1c8] sm:$0xff]
    %v141 = vld [vmem:[#allocation3 + $0x1d0] sm:$0xff]
    %v142 = vld [vmem:[#allocation3 + $0x1d8] sm:$0xff]
    %v143 = vld [vmem:[#allocation3 + $0x1e0] sm:$0xff]
    %v144 = vld [vmem:[#allocation3 + $0x1e8] sm:$0xff]
    %v145 = vld [vmem:[#allocation3 + $0x1f0] sm:$0xff]
    %v146 = vld [vmem:[#allocation3 + $0x1f8] sm:$0xff]
    %v151 = vunpack.c.l.b16 %v79
    %v152 = vunpack.c.l.b16 %v80
    %v153 = vunpack.c.l.b16 %v81
    %v154 = vunpack.c.l.b16 %v82
    %v155 = vrot.slane %v153, 7
    %vm156 = vcmask 1041409
    %v157 = vsel %vm156, %v155, %v151
    %v158 = vrot.slane %v154, 7
    %v159 = vsel %vm156, %v158, %v152
    %v160 = vpack.c.b16 %v157, %v157
    %v161 = vpack.c.b16 %v159, %v159
    %v228 = vunpack.c.l.b16 %v83
    %v229 = vunpack.c.h.b16 %v83
    %v230 = vunpack.c.l.b16 %v84
    %v231 = vunpack.c.h.b16 %v84
    %v232 = vunpack.c.l.b16 %v85
    %v233 = vunpack.c.h.b16 %v85
    %v234 = vunpack.c.l.b16 %v86
    %v235 = vunpack.c.h.b16 %v86
    %v236 = vunpack.c.l.b16 %v87
    %v237 = vunpack.c.h.b16 %v87
    %v238 = vunpack.c.l.b16 %v88
    %v239 = vunpack.c.h.b16 %v88
    %v240 = vunpack.c.l.b16 %v89
    %v241 = vunpack.c.h.b16 %v89
    %v242 = vunpack.c.l.b16 %v90
    %v243 = vunpack.c.h.b16 %v90
    %v244 = vunpack.c.l.b16 %v91
    %v245 = vunpack.c.h.b16 %v91
    %v246 = vunpack.c.l.b16 %v92
    %v247 = vunpack.c.h.b16 %v92
    %v248 = vunpack.c.l.b16 %v93
    %v249 = vunpack.c.h.b16 %v93
    %v250 = vunpack.c.l.b16 %v94
    %v251 = vunpack.c.h.b16 %v94
    %v252 = vunpack.c.l.b16 %v95
    %v253 = vunpack.c.h.b16 %v95
    %v254 = vunpack.c.l.b16 %v96
    %v255 = vunpack.c.h.b16 %v96
    %v256 = vunpack.c.l.b16 %v97
    %v257 = vunpack.c.h.b16 %v97
    %v258 = vunpack.c.l.b16 %v98
    %v259 = vunpack.c.h.b16 %v98
    %v260 = vunpack.c.l.b16 %v99
    %v261 = vunpack.c.h.b16 %v99
    %v262 = vunpack.c.l.b16 %v100
    %v263 = vunpack.c.h.b16 %v100
    %v264 = vunpack.c.l.b16 %v101
    %v265 = vunpack.c.h.b16 %v101
    %v266 = vunpack.c.l.b16 %v102
    %v267 = vunpack.c.h.b16 %v102
    %v268 = vunpack.c.l.b16 %v103
    %v269 = vunpack.c.h.b16 %v103
    %v270 = vunpack.c.l.b16 %v104
    %v271 = vunpack.c.h.b16 %v104
    %v272 = vunpack.c.l.b16 %v105
    %v273 = vunpack.c.h.b16 %v105
    %v274 = vunpack.c.l.b16 %v106
    %v275 = vunpack.c.h.b16 %v106
    %v276 = vunpack.c.l.b16 %v107
    %v277 = vunpack.c.h.b16 %v107
    %v278 = vunpack.c.l.b16 %v108
    %v279 = vunpack.c.h.b16 %v108
    %v280 = vunpack.c.l.b16 %v109
    %v281 = vunpack.c.h.b16 %v109
    %v282 = vunpack.c.l.b16 %v110
    %v283 = vunpack.c.h.b16 %v110
    %v284 = vunpack.c.l.b16 %v111
    %v285 = vunpack.c.h.b16 %v111
    %v286 = vunpack.c.l.b16 %v112
    %v287 = vunpack.c.h.b16 %v112
    %v288 = vunpack.c.l.b16 %v113
    %v289 = vunpack.c.h.b16 %v113
    %v290 = vunpack.c.l.b16 %v114
    %v291 = vunpack.c.h.b16 %v114
    %v292 = vunpack.c.l.b16 %v115
    %v293 = vunpack.c.h.b16 %v115
    %v294 = vunpack.c.l.b16 %v116
    %v295 = vunpack.c.h.b16 %v116
    %v296 = vunpack.c.l.b16 %v117
    %v297 = vunpack.c.h.b16 %v117
    %v298 = vunpack.c.l.b16 %v118
    %v299 = vunpack.c.h.b16 %v118
    %v300 = vunpack.c.l.b16 %v119
    %v301 = vunpack.c.h.b16 %v119
    %v302 = vunpack.c.l.b16 %v120
    %v303 = vunpack.c.h.b16 %v120
    %v304 = vunpack.c.l.b16 %v121
    %v305 = vunpack.c.h.b16 %v121
    %v306 = vunpack.c.l.b16 %v122
    %v307 = vunpack.c.h.b16 %v122
    %v308 = vunpack.c.l.b16 %v123
    %v309 = vunpack.c.h.b16 %v123
    %v310 = vunpack.c.l.b16 %v124
    %v311 = vunpack.c.h.b16 %v124
    %v312 = vunpack.c.l.b16 %v125
    %v313 = vunpack.c.h.b16 %v125
    %v314 = vunpack.c.l.b16 %v126
    %v315 = vunpack.c.h.b16 %v126
    %v316 = vunpack.c.l.b16 %v127
    %v317 = vunpack.c.h.b16 %v127
    %v318 = vunpack.c.l.b16 %v128
    %v319 = vunpack.c.h.b16 %v128
    %v320 = vunpack.c.l.b16 %v129
    %v321 = vunpack.c.h.b16 %v129
    %v322 = vunpack.c.l.b16 %v130
    %v323 = vunpack.c.h.b16 %v130
    %v324 = vunpack.c.l.b16 %v131
    %v325 = vunpack.c.h.b16 %v131
    %v326 = vunpack.c.l.b16 %v132
    %v327 = vunpack.c.h.b16 %v132
    %v328 = vunpack.c.l.b16 %v133
    %v329 = vunpack.c.h.b16 %v133
    %v330 = vunpack.c.l.b16 %v134
    %v331 = vunpack.c.h.b16 %v134
    %v332 = vunpack.c.l.b16 %v135
    %v333 = vunpack.c.h.b16 %v135
    %v334 = vunpack.c.l.b16 %v136
    %v335 = vunpack.c.h.b16 %v136
    %v336 = vunpack.c.l.b16 %v137
    %v337 = vunpack.c.h.b16 %v137
    %v338 = vunpack.c.l.b16 %v138
    %v339 = vunpack.c.h.b16 %v138
    %v340 = vunpack.c.l.b16 %v139
    %v341 = vunpack.c.h.b16 %v139
    %v342 = vunpack.c.l.b16 %v140
    %v343 = vunpack.c.h.b16 %v140
    %v344 = vunpack.c.l.b16 %v141
    %v345 = vunpack.c.h.b16 %v141
    %v346 = vunpack.c.l.b16 %v142
    %v347 = vunpack.c.h.b16 %v142
    %v348 = vunpack.c.l.b16 %v143
    %v349 = vunpack.c.h.b16 %v143
    %v350 = vunpack.c.l.b16 %v144
    %v351 = vunpack.c.h.b16 %v144
    %v352 = vunpack.c.l.b16 %v145
    %v353 = vunpack.c.h.b16 %v145
    %v354 = vunpack.c.l.b16 %v146
    %v355 = vunpack.c.h.b16 %v146
    %v356 = vpack.c.b16 %v232, %v228
    %v357 = vpack.c.b16 %v233, %v229
    %v358 = vpack.c.b16 %v234, %v230
    %v359 = vpack.c.b16 %v235, %v231
    %v360 = vpack.c.b16 %v240, %v236
    %v361 = vpack.c.b16 %v241, %v237
    %v362 = vpack.c.b16 %v242, %v238
    %v363 = vpack.c.b16 %v243, %v239
    %v364 = vpack.c.b16 %v248, %v244
    %v365 = vpack.c.b16 %v249, %v245
    %v366 = vpack.c.b16 %v250, %v246
    %v367 = vpack.c.b16 %v251, %v247
    %v368 = vpack.c.b16 %v256, %v252
    %v369 = vpack.c.b16 %v257, %v253
    %v370 = vpack.c.b16 %v258, %v254
    %v371 = vpack.c.b16 %v259, %v255
    %v372 = vpack.c.b16 %v264, %v260
    %v373 = vpack.c.b16 %v265, %v261
    %v374 = vpack.c.b16 %v266, %v262
    %v375 = vpack.c.b16 %v267, %v263
    %v376 = vpack.c.b16 %v272, %v268
    %v377 = vpack.c.b16 %v273, %v269
    %v378 = vpack.c.b16 %v274, %v270
    %v379 = vpack.c.b16 %v275, %v271
    %v380 = vpack.c.b16 %v280, %v276
    %v381 = vpack.c.b16 %v281, %v277
    %v382 = vpack.c.b16 %v282, %v278
    %v383 = vpack.c.b16 %v283, %v279
    %v384 = vpack.c.b16 %v288, %v284
    %v385 = vpack.c.b16 %v289, %v285
    %v386 = vpack.c.b16 %v290, %v286
    %v387 = vpack.c.b16 %v291, %v287
    %v388 = vpack.c.b16 %v296, %v292
    %v389 = vpack.c.b16 %v297, %v293
    %v390 = vpack.c.b16 %v298, %v294
    %v391 = vpack.c.b16 %v299, %v295
    %v392 = vpack.c.b16 %v304, %v300
    %v393 = vpack.c.b16 %v305, %v301
    %v394 = vpack.c.b16 %v306, %v302
    %v395 = vpack.c.b16 %v307, %v303
    %v396 = vpack.c.b16 %v312, %v308
    %v397 = vpack.c.b16 %v313, %v309
    %v398 = vpack.c.b16 %v314, %v310
    %v399 = vpack.c.b16 %v315, %v311
    %v400 = vpack.c.b16 %v320, %v316
    %v401 = vpack.c.b16 %v321, %v317
    %v402 = vpack.c.b16 %v322, %v318
    %v403 = vpack.c.b16 %v323, %v319
    %v404 = vpack.c.b16 %v328, %v324
    %v405 = vpack.c.b16 %v329, %v325
    %v406 = vpack.c.b16 %v330, %v326
    %v407 = vpack.c.b16 %v331, %v327
    %v408 = vpack.c.b16 %v336, %v332
    %v409 = vpack.c.b16 %v337, %v333
    %v410 = vpack.c.b16 %v338, %v334
    %v411 = vpack.c.b16 %v339, %v335
    %v412 = vpack.c.b16 %v344, %v340
    %v413 = vpack.c.b16 %v345, %v341
    %v414 = vpack.c.b16 %v346, %v342
    %v415 = vpack.c.b16 %v347, %v343
    %v416 = vpack.c.b16 %v352, %v348
    %v417 = vpack.c.b16 %v353, %v349
    %v418 = vpack.c.b16 %v354, %v350
    %v419 = vpack.c.b16 %v355, %v351
    %484 = vmatprep.subr.bf16.mxu0 %v357
    %485 = vmatpush1.bf16.msra.mxu0 %v356
    %486 = vmatprep.subr.bf16.mxu0 %v361
    %487 = vmatpush1.bf16.msra.mxu0 %v360
    %488 = vmatprep.subr.bf16.mxu0 %v365
    %489 = vmatpush1.bf16.msra.mxu0 %v364
    %490 = vmatprep.subr.bf16.mxu0 %v369
    %491 = vmatpush1.bf16.msra.mxu0 %v368
    %492 = vmatprep.subr.bf16.mxu0 %v373
    %493 = vmatpush1.bf16.msra.mxu0 %v372
    %494 = vmatprep.subr.bf16.mxu0 %v377
    %495 = vmatpush1.bf16.msra.mxu0 %v376
    %496 = vmatprep.subr.bf16.mxu0 %v381
    %497 = vmatpush1.bf16.msra.mxu0 %v380
    %498 = vmatprep.subr.bf16.mxu0 %v385
    %499 = vmatpush1.bf16.msra.mxu0 %v384
    %500 = vmatprep.subr.bf16.mxu0 %v389
    %501 = vmatpush1.bf16.msra.mxu0 %v388
    %502 = vmatprep.subr.bf16.mxu0 %v393
    %503 = vmatpush1.bf16.msra.mxu0 %v392
    %504 = vmatprep.subr.bf16.mxu0 %v397
    %505 = vmatpush1.bf16.msra.mxu0 %v396
    %506 = vmatprep.subr.bf16.mxu0 %v401
    %507 = vmatpush1.bf16.msra.mxu0 %v400
    %508 = vmatprep.subr.bf16.mxu0 %v405
    %509 = vmatpush1.bf16.msra.mxu0 %v404
    %510 = vmatprep.subr.bf16.mxu0 %v409
    %511 = vmatpush1.bf16.msra.mxu0 %v408
    %512 = vmatprep.subr.bf16.mxu0 %v413
    %513 = vmatpush1.bf16.msra.mxu0 %v412
    %514 = vmatprep.subr.bf16.mxu0 %v417
    %515 = vmatpush1.bf16.msra.mxu0 %v416
    %516 = vmatprep.mubr.bf16.mxu0 %v161
    %517 = vmatmul.mubr.bf16.gmra.mrb[0].mxu0 %v160
    %v518 = vpop.f32.mrb[0].mxu0
    %v519 = vadd.f32 0.0, %v518
    %v520 = vpop.f32.mrb[0].mxu0
    %v521 = vadd.f32 0.0, %v520
    %v522 = vpop.f32.mrb[0].mxu0
    %v523 = vpop.f32.mrb[0].mxu0
    %524 = vdwg.mxu0
    %525 = vmatprep.subr.bf16.mxu0 %v359
    %526 = vmatpush1.bf16.msra.mxu0 %v358
    %527 = vmatprep.subr.bf16.mxu0 %v363
    %528 = vmatpush1.bf16.msra.mxu0 %v362
    %529 = vmatprep.subr.bf16.mxu0 %v367
    %530 = vmatpush1.bf16.msra.mxu0 %v366
    %531 = vmatprep.subr.bf16.mxu0 %v371
    %532 = vmatpush1.bf16.msra.mxu0 %v370
    %533 = vmatprep.subr.bf16.mxu0 %v375
    %534 = vmatpush1.bf16.msra.mxu0 %v374
    %535 = vmatprep.subr.bf16.mxu0 %v379
    %536 = vmatpush1.bf16.msra.mxu0 %v378
    %537 = vmatprep.subr.bf16.mxu0 %v383
    %538 = vmatpush1.bf16.msra.mxu0 %v382
    %539 = vmatprep.subr.bf16.mxu0 %v387
    %540 = vmatpush1.bf16.msra.mxu0 %v386
    %541 = vmatprep.subr.bf16.mxu0 %v391
    %542 = vmatpush1.bf16.msra.mxu0 %v390
    %543 = vmatprep.subr.bf16.mxu0 %v395
    %544 = vmatpush1.bf16.msra.mxu0 %v394
    %545 = vmatprep.subr.bf16.mxu0 %v399
    %546 = vmatpush1.bf16.msra.mxu0 %v398
    %547 = vmatprep.subr.bf16.mxu0 %v403
    %548 = vmatpush1.bf16.msra.mxu0 %v402
    %549 = vmatprep.subr.bf16.mxu0 %v407
    %550 = vmatpush1.bf16.msra.mxu0 %v406
    %551 = vmatprep.subr.bf16.mxu0 %v411
    %552 = vmatpush1.bf16.msra.mxu0 %v410
    %553 = vmatprep.subr.bf16.mxu0 %v415
    %554 = vmatpush1.bf16.msra.mxu0 %v414
    %555 = vmatprep.subr.bf16.mxu0 %v419
    %556 = vmatpush1.bf16.msra.mxu0 %v418
    %557 = vmatprep.mubr.bf16.mxu0 %v161
    %558 = vmatmul.mubr.bf16.gmra.mrb[0].mxu0 %v160
    %v559 = vpop.f32.mrb[0].mxu0
    %v560 = vadd.f32 0.0, %v559
    %v561 = vpop.f32.mrb[0].mxu0
    %v562 = vadd.f32 0.0, %v561
    %v563 = vpop.f32.mrb[0].mxu0
    %v564 = vpop.f32.mrb[0].mxu0
    %565 = vdwg.mxu0
    %v570 = vcombine.low %v519, %v521
    %v571 = vcombine.low %v560, %v562
    %v573 = vunpack.c.l.s4 1983009808
    %v574 = vunpack.c.0.s8 %v573
    %v575 = vlaneseq
    %v576 = vshrl.u32 %v575, 7
    %v577 = vsub.s32 %v574, %v576
    %v578 = vrot.slane %v570, %v577
    %v580 = vunpack.c.l.s4 1983009808
    %v581 = vunpack.c.0.s8 %v580
    %v582 = vlaneseq
    %v583 = vshrl.u32 %v582, 7
    %v584 = vsub.s32 %v581, %v583
    %v585 = vrot.slane %v571, %v584
    %v586 = vcombine.low %v578, %v585
    %v588 = vadd.f32 %v56, %v586
    %589 = vst [vmem:[#allocation2] sm:$0xff] %v588
    // Predicated region
    $region22: #{tpu_custom_call.1} parent=1 // pred_check
      %p590 = pneg %p29
    $region23: #{tpu_custom_call.1} parent=1 // pred_check_branch
      %592 = sbr.rel (%p590) target = $region25
    $region24: #{tpu_custom_call.1} parent=1 // pred_region
      %v593 = vld [vmem:[#allocation2] sm:$0xff]
      %v594 = vld [vmem:[%s2] sm:$0xf]
      %v596 = vlaneseq
      %v597 = vshrl.u32 %v596, 7
      %v598 = vsub.s32 0, %v597
      %v599 = vrot.slane %v594, %v598
      %v600 = vlaneseq
      %v601 = vshrl.u32 %v600, 7
      %v602 = vsub.s32 1, %v601
      %v603 = vrot.slane %v594, %v602
      %v604 = vlaneseq
      %v605 = vshrl.u32 %v604, 7
      %v606 = vsub.s32 2, %v605
      %v607 = vrot.slane %v594, %v606
      %v608 = vlaneseq
      %v609 = vshrl.u32 %v608, 7
      %v610 = vsub.s32 3, %v609
      %v611 = vrot.slane %v594, %v610
      %v612 = vcombine.low %v599, %v603
      %v613 = vcombine.low %v607, %v611
      %v615 = vunpack.c.l.s4 1983009808
      %v616 = vunpack.c.0.s8 %v615
      %v617 = vlaneseq
      %v618 = vshrl.u32 %v617, 7
      %v619 = vsub.s32 %v616, %v618
      %v620 = vrot.slane %v612, %v619
      %v622 = vunpack.c.l.s4 1983009808
      %v623 = vunpack.c.0.s8 %v622
      %v624 = vlaneseq
      %v625 = vshrl.u32 %v624, 7
      %v626 = vsub.s32 %v623, %v625
      %v627 = vrot.slane %v613, %v626
      %v628 = vcombine.low %v620, %v627
      %v630 = vadd.f32 %v593, %v628
      %v631 = vmax.f32 %v630, 0.0
      %632 = vst [vmem:[#allocation6] sm:$0xff] %v631
    $region25: #{tpu_custom_call.1} parent=1 // pred_fallthru
      _
    // Predicated region
    $region26: #{tpu_custom_call.1} parent=1 // pred_check
      _
    $region27: #{tpu_custom_call.1} parent=1 // pred_check_branch
      %634 = sbr.rel (0) target = $region29
    $region28: #{tpu_custom_call.1} parent=1 // pred_region
      %s636 = ssub.s32 128, 128
      %637 = vsyncadd [#allocation5], %s636
      %s639 = sshll.u32 [#allocation6], 4
      %s640 = int_to_ptr.vmem [resolvable:$true] %s639
      %642 = dma.vmem_to_hbm [thread:$0]  %s640, 128, %s3, [#allocation5]
    $region29: #{tpu_custom_call.1} parent=1 // pred_fallthru
      _
    // Predicated region
    $region30: #{tpu_custom_call.1} parent=1 // pred_check
      _
    $region31: #{tpu_custom_call.1} parent=1 // pred_check_branch
      %644 = sbr.rel (0) target = $region33
    $region32: #{tpu_custom_call.1} parent=1 // pred_region
      %645 = dma.done [#allocation5], 128
    $region33: #{tpu_custom_call.1} parent=1 // pred_fallthru
      _
    %646 = vsyncpa [#allocation4], 1
    %647 = vsyncpa [#allocation5], 1

</llo_original>
